<compile_context>
chip_gen: v6e
topology: v6e:2x2x1
jax: 0.10.0
libtpu: 0.0.40
codegen_flags: <defaults>
</compile_context>

<pallas_src>
import jax
import jax.numpy as jnp
import numpy as np
from jax.experimental import pallas as pl
from jax.experimental.pallas import tpu as pltpu

# Static problem sizes from the module (ModelAttributes.FNN.input_shape == (50,)).
IN_F, HID, OUT_F = 50, 25, 2


def fnn_kernel(x_ref, wft_ref, bf_ref, o_ref):
    """One batch tile of the folded linear.

    x_ref  : VMEM (TB, IN_F)    input tile (native batch-major layout)
    wft_ref: VMEM (IN_F, OUT_F) folded weight Wf^T = W1^T @ W2^T (resident)
    bf_ref : VMEM (1, OUT_F)    folded bias  bf   = W2 @ b1 + b2 (resident)
    o_ref  : VMEM (TB, OUT_F)   output tile
    """
    o_ref[...] = (
        jnp.dot(
            x_ref[...],
            wft_ref[...],
            preferred_element_type=jnp.float32,
            precision=jax.lax.Precision.HIGHEST,
        )
        + bf_ref[...]
    )


def _round_up(n, m):
    return ((n + m - 1) // m) * m


def fnn_forward(x, w1, b1, w2, b2, *, batch_tile=1024):
    """Fnn forward: (x @ W1^T + b1) @ W2^T + b2.

    x : (B, IN_F) f32
    w1: (HID, IN_F) f32, b1: (HID,) f32     (PyTorch nn.Linear layout)
    w2: (OUT_F, HID) f32, b2: (OUT_F,) f32
    returns (B, OUT_F) f32
    """
    B = x.shape[0]

    # Fold the two layers (valid because there is no intermediate activation).
    # Wf^T = W1^T @ W2^T  -> (IN_F, OUT_F);  bf = W2 @ b1 + b2 -> (OUT_F,)
    wft = jnp.dot(
        jnp.transpose(w1).astype(jnp.float32),
        jnp.transpose(w2).astype(jnp.float32),
        precision=jax.lax.Precision.HIGHEST,
    )
    bf = (
        jnp.dot(w2.astype(jnp.float32), b1.astype(jnp.float32),
                precision=jax.lax.Precision.HIGHEST)
        + b2.astype(jnp.float32)
    ).reshape(1, OUT_F)

    # Batch tile: multiple of 8 sublanes, capped at `batch_tile`.
    tb = _round_up(min(batch_tile, B), 8)
    bp = _round_up(B, tb)

    xp = x.astype(jnp.float32)
    if bp != B:
        xp = jnp.pad(xp, ((0, bp - B), (0, 0)))  # padded rows sliced off below

    y = pl.pallas_call(
        fnn_kernel,
        out_shape=jax.ShapeDtypeStruct((bp, OUT_F), jnp.float32),
        grid=(bp // tb,),
        in_specs=[
            pl.BlockSpec((tb, IN_F), lambda i: (i, 0)),      # x batch tile
            pl.BlockSpec((IN_F, OUT_F), lambda i: (0, 0)),   # Wf^T (resident)
            pl.BlockSpec((1, OUT_F), lambda i: (0, 0)),      # bf   (resident)
        ],
        out_specs=pl.BlockSpec((tb, OUT_F), lambda i: (i, 0)),
        compiler_params=pltpu.CompilerParams(
            dimension_semantics=("parallel",)),
    )(xp, wft, bf)

    return y[:B]


def reference_forward(x, w1, b1, w2, b2):
    # Host float64 reference (unfolded, layer by layer — matches nn.Sequential).
    x64 = np.asarray(x, np.float64)
    h = x64 @ np.asarray(w1, np.float64).T + np.asarray(b1, np.float64)
    return h @ np.asarray(w2, np.float64).T + np.asarray(b2, np.float64)


if __name__ == "__main__":
    key = jax.random.PRNGKey(0)
    kx, kx2, kw1, kb1, kw2, kb2 = jax.random.split(key, 6)

    # Deterministic PyTorch-style uniform(-1/sqrt(fan_in), 1/sqrt(fan_in)) init.
    bound1 = 1.0 / np.sqrt(IN_F)
    bound2 = 1.0 / np.sqrt(HID)
    w1 = jax.random.uniform(kw1, (HID, IN_F), jnp.float32, -bound1, bound1)
    b1 = jax.random.uniform(kb1, (HID,), jnp.float32, -bound1, bound1)
    w2 = jax.random.uniform(kw2, (OUT_F, HID), jnp.float32, -bound2, bound2)
    b2 = jax.random.uniform(kb2, (OUT_F,), jnp.float32, -bound2, bound2)

    # Small FNN-shaped batch.
    B = 2
    x = jax.random.normal(kx, (B, IN_F), jnp.float32)
    out = jax.block_until_ready(fnn_forward(x, w1, b1, w2, b2))
    ref = reference_forward(x, w1, b1, w2, b2)
    np.testing.assert_allclose(np.asarray(out), ref, rtol=1e-5, atol=1e-5)

    # Ragged / multi-tile check: B not a multiple of the batch tile.
    B2 = 300
    x2 = jax.random.normal(kx2, (B2, IN_F), jnp.float32)
    out2 = jax.block_until_ready(fnn_forward(x2, w1, b1, w2, b2, batch_tile=128))
    ref2 = reference_forward(x2, w1, b1, w2, b2)
    np.testing.assert_allclose(np.asarray(out2), ref2, rtol=1e-5, atol=1e-5)

    print("KERNEL_OK")
</pallas_src>

<mosaic_0001>
module attributes {stable_mosaic.version = 11 : i64} {
  func.func @fnn_kernel(%arg0: i32, %arg1: memref<8x50xf32, #tpu.memory_space<vmem>>, %arg2: memref<50x2xf32, #tpu.memory_space<vmem>>, %arg3: memref<1x2xf32, #tpu.memory_space<vmem>>, %arg4: memref<8x2xf32, #tpu.memory_space<vmem>>) attributes {dimension_semantics = [#tpu.dimension_semantics<parallel>], iteration_bounds = array<i64: 1>, scalar_prefetch = 0 : i64, scratch_operands = 0 : i64, tpu.core_type = #tpu.core_type<tc>, window_params = [{transform_indices = @transform_0, window_bounds = array<i64: 8, 50>}, {pipeline_mode = #tpu.pipeline_mode<synchronous>, transform_indices = @transform_1, window_bounds = array<i64: 50, 2>}, {pipeline_mode = #tpu.pipeline_mode<synchronous>, transform_indices = @transform_2, window_bounds = array<i64: 1, 2>}, {transform_indices = @transform_3, window_bounds = array<i64: 8, 2>}]} {
    %c0 = arith.constant 0 : index
    %c0_0 = arith.constant 0 : index
    %0 = vector.load %arg1[%c0, %c0_0] : memref<8x50xf32, #tpu.memory_space<vmem>>, vector<8x50xf32>
    %c0_1 = arith.constant 0 : index
    %c0_2 = arith.constant 0 : index
    %1 = vector.load %arg2[%c0_1, %c0_2] : memref<50x2xf32, #tpu.memory_space<vmem>>, vector<50x2xf32>
    %cst = arith.constant dense<0.000000e+00> : vector<8x2xf32>
    %2 = tpu.matmul %0, %1, %cst {dimension_numbers = #tpu.dot_dimension_numbers<[1], [0], [0], [1], [0, 0, 1, 1], [], []>, precision = #tpu.contract_precision<fp32>} : vector<8x50xf32>, vector<50x2xf32>, vector<8x2xf32> -> vector<8x2xf32>
    %c0_3 = arith.constant 0 : index
    %c0_4 = arith.constant 0 : index
    %3 = vector.load %arg3[%c0_3, %c0_4] : memref<1x2xf32, #tpu.memory_space<vmem>>, vector<1x2xf32>
    %4 = vector.broadcast %3 : vector<1x2xf32> to vector<8x2xf32>
    %5 = arith.addf %2, %4 : vector<8x2xf32>
    %c0_5 = arith.constant 0 : index
    %c0_6 = arith.constant 0 : index
    %6 = vector.load %arg4[%c0_5, %c0_6] : memref<8x2xf32, #tpu.memory_space<vmem>>, vector<8x2xf32>
    tpu.vector_store %arg4[%c0_5, %c0_6], %5 {strides = array<i32>} : memref<8x2xf32, #tpu.memory_space<vmem>>, vector<8x2xf32>,
    return
  }
  func.func @transform_0(%arg0: i32) -> (i32, i32) {
    %c0_i32 = arith.constant 0 : i32
    %c0_i32_0 = arith.constant 0 : i32
    return %arg0, %c0_i32 : i32, i32
  }
  func.func @transform_1(%arg0: i32) -> (i32, i32) {
    %c0_i32 = arith.constant 0 : i32
    %c0_i32_0 = arith.constant 0 : i32
    %c0_i32_1 = arith.constant 0 : i32
    return %c0_i32, %c0_i32_0 : i32, i32
  }
  func.func @transform_2(%arg0: i32) -> (i32, i32) {
    %c0_i32 = arith.constant 0 : i32
    %c0_i32_0 = arith.constant 0 : i32
    %c0_i32_1 = arith.constant 0 : i32
    return %c0_i32, %c0_i32_0 : i32, i32
  }
  func.func @transform_3(%arg0: i32) -> (i32, i32) {
    %c0_i32 = arith.constant 0 : i32
    %c0_i32_0 = arith.constant 0 : i32
    return %arg0, %c0_i32 : i32, i32
  }
}

</mosaic_0001>

<llo_original>
// kernel: tpu_custom_call.1
$region0: #{tpu_custom_call.1}
  #allocation0 [shape = 'u32[]', space=smem, size = 0x4, offset = 0x4, fixed_abs, tag = 'smem constant byte address 0x4 - core index']
  #allocation1 [shape = 'u32[144,128]{1,0:T(1,128)}', space=vmem, size = 0x12000, scoped, tag = 'internal scratch']
  %s0 = inlined_call_operand.vmem [shape: f32[8,50], index: 0, kind: input, shape index: {}]
  %s1 = inlined_call_operand.vmem [shape: f32[50,2], index: 1, kind: input, shape index: {}]
  %s2 = inlined_call_operand.vmem [shape: f32[1,2], index: 2, kind: input, shape index: {}]
  %s3 = inlined_call_operand.vmem [shape: f32[8,2], index: 3, kind: output, shape index: {}]
  %s4 = sld [smem:[#allocation0]]
  $region22: #{tpu_custom_call.1} parent=0
    _
  %s6 = ssub.s32 1, %s4
  %s7 = scalar_select 0, %s6, %s4
  // Predicated region
  $region2: #{tpu_custom_call.1} parent=0 // pred_check
    _
  $region3: #{tpu_custom_call.1} parent=0 // pred_check_branch
    %9 = sbr.rel (0) target = $region5
  $region4: #{tpu_custom_call.1} parent=0 // pred_region
    _
  $region5: #{tpu_custom_call.1} parent=0 // pred_fallthru
    _
  // Predicated region
  $region6: #{tpu_custom_call.1} parent=0 // pred_check
    _
  $region7: #{tpu_custom_call.1} parent=0 // pred_check_branch
    %11 = sbr.rel (0) target = $region9
  $region8: #{tpu_custom_call.1} parent=0 // pred_region
    _
  $region9: #{tpu_custom_call.1} parent=0 // pred_fallthru
    _
  // Predicated region
  $region10: #{tpu_custom_call.1} parent=0 // pred_check
    _
  $region11: #{tpu_custom_call.1} parent=0 // pred_check_branch
    %13 = sbr.rel (0) target = $region13
  $region12: #{tpu_custom_call.1} parent=0 // pred_region
    _
  $region13: #{tpu_custom_call.1} parent=0 // pred_fallthru
    _
  %v14 = vld [vmem:[%s0] sm:$0xff]
  %v15 = vld [vmem:[%s1] sm:$0xff]
  %v16 = vld [vmem:[%s1 + $0x8] sm:$0xff]
  %v17 = vld [vmem:[%s1 + $0x10] sm:$0xff]
  %v18 = vld [vmem:[%s1 + $0x18] sm:$0xff]
  %v19 = vld [vmem:[%s1 + $0x20] sm:$0xff]
  %v20 = vld [vmem:[%s1 + $0x28] sm:$0xff]
  %v21 = vld [vmem:[%s1 + $0x30] sm:$0x3]
  %v22 = vld [vmem:[%s2] sm:$0x1]
  %v24 = vlaneseq
  %v25 = vshrl.u32 %v24, 7
  %v26 = vsub.s32 0, %v25
  %v27 = vrot.slane %v22, %v26
  %vm29 = vcmask 408576
  %v31 = vsel %vm29, %v14, 0
  %vm33 = vcmask 1041408
  %v35 = vsel %vm33, %v21, 0
  %37 = vmatprep.subr.mxu0 0.0
  %38 = vmatpush1.msra.mxu0 0.0
  %39 = vmatprep.subr.mxu0 0.0
  %40 = vmatpush1.msra.mxu0 0.0
  %41 = vmatprep.subr.mxu0 0.0
  %42 = vmatpush1.msra.mxu0 0.0
  %43 = vmatprep.subr.mxu0 0.0
  %44 = vmatpush1.msra.mxu0 0.0
  %45 = vmatprep.subr.mxu0 0.0
  %46 = vmatpush1.msra.mxu0 0.0
  %47 = vmatprep.subr.mxu0 0.0
  %48 = vmatpush1.msra.mxu0 0.0
  %49 = vmatprep.subr.mxu0 0.0
  %50 = vmatpush1.msra.mxu0 0.0
  %51 = vmatprep.subr.mxu0 0.0
  %52 = vmatpush1.msra.mxu0 0.0
  %53 = vmatprep.subr.mxu0 0.0
  %54 = vmatpush1.msra.mxu0 0.0
  %55 = vmatprep.subr.mxu0 0.0
  %v56 = vand.u32 %v35, 4294901760
  %57 = vmatpush1.msra.mxu0 %v56
  %58 = vmatprep.subr.mxu0 0.0
  %v59 = vand.u32 %v20, 4294901760
  %60 = vmatpush1.msra.mxu0 %v59
  %61 = vmatprep.subr.mxu0 0.0
  %v62 = vand.u32 %v19, 4294901760
  %63 = vmatpush1.msra.mxu0 %v62
  %64 = vmatprep.subr.mxu0 0.0
  %v65 = vand.u32 %v18, 4294901760
  %66 = vmatpush1.msra.mxu0 %v65
  %67 = vmatprep.subr.mxu0 0.0
  %v68 = vand.u32 %v17, 4294901760
  %69 = vmatpush1.msra.mxu0 %v68
  %70 = vmatprep.subr.mxu0 0.0
  %v71 = vand.u32 %v16, 4294901760
  %72 = vmatpush1.msra.mxu0 %v71
  %73 = vmatprep.subr.mxu0 0.0
  %v74 = vand.u32 %v15, 4294901760
  %75 = vmatpush1.msra.mxu0 %v74
  %76 = vmatprep.subr.mxu0 0.0
  %77 = vmatpush2.msra.mxu0 0.0
  %78 = vmatprep.subr.mxu0 0.0
  %79 = vmatpush2.msra.mxu0 0.0
  %80 = vmatprep.subr.mxu0 0.0
  %81 = vmatpush2.msra.mxu0 0.0
  %82 = vmatprep.subr.mxu0 0.0
  %83 = vmatpush2.msra.mxu0 0.0
  %84 = vmatprep.subr.mxu0 0.0
  %85 = vmatpush2.msra.mxu0 0.0
  %86 = vmatprep.subr.mxu0 0.0
  %87 = vmatpush2.msra.mxu0 0.0
  %88 = vmatprep.subr.mxu0 0.0
  %89 = vmatpush2.msra.mxu0 0.0
  %90 = vmatprep.subr.mxu0 0.0
  %91 = vmatpush2.msra.mxu0 0.0
  %92 = vmatprep.subr.mxu0 0.0
  %93 = vmatpush2.msra.mxu0 0.0
  %94 = vmatprep.subr.mxu0 0.0
  %95 = vmatpush2.msra.mxu0 0.0
  %96 = vmatprep.subr.mxu0 0.0
  %97 = vmatpush2.msra.mxu0 0.0
  %98 = vmatprep.subr.mxu0 0.0
  %99 = vmatpush2.msra.mxu0 0.0
  %100 = vmatprep.subr.mxu0 0.0
  %101 = vmatpush2.msra.mxu0 0.0
  %102 = vmatprep.subr.mxu0 0.0
  %103 = vmatpush2.msra.mxu0 0.0
  %104 = vmatprep.subr.mxu0 0.0
  %105 = vmatpush2.msra.mxu0 0.0
  %106 = vmatprep.subr.mxu0 0.0
  %107 = vmatpush2.msra.mxu0 0.0
  %108 = vmatprep.mubr.f32.mxu0 0.0
  %v109 = vand.u32 %v31, 4294901760
  %v110 = vsub.f32 %v31, %v109
  %v111 = vand.u32 %v110, 4294901760
  %v112 = vsub.f32 %v110, %v111
  %v113 = vand.u32 %v112, 4294901760
  %114 = vmatmul.mubr.f32.gmra.mxu0 %v113
  %v115 = vpop.f32.mrf.mxu0
  %v116 = vadd.f32 %v27, %v115
  %v117 = vpop.f32.mrf.mxu0
  %118 = vdwg.mxu0
  %119 = vmatprep.subr.mxu0 0.0
  %120 = vmatpush1.msra.mxu0 0.0
  %121 = vmatprep.subr.mxu0 0.0
  %122 = vmatpush1.msra.mxu0 0.0
  %123 = vmatprep.subr.mxu0 0.0
  %124 = vmatpush1.msra.mxu0 0.0
  %125 = vmatprep.subr.mxu0 0.0
  %126 = vmatpush1.msra.mxu0 0.0
  %127 = vmatprep.subr.mxu0 0.0
  %128 = vmatpush1.msra.mxu0 0.0
  %129 = vmatprep.subr.mxu0 0.0
  %130 = vmatpush1.msra.mxu0 0.0
  %131 = vmatprep.subr.mxu0 0.0
  %132 = vmatpush1.msra.mxu0 0.0
  %133 = vmatprep.subr.mxu0 0.0
  %134 = vmatpush1.msra.mxu0 0.0
  %135 = vmatprep.subr.mxu0 0.0
  %136 = vmatpush1.msra.mxu0 0.0
  %137 = vmatprep.subr.mxu0 0.0
  %v138 = vand.u32 %v35, 4294901760
  %v139 = vsub.f32 %v35, %v138
  %v140 = vand.u32 %v139, 4294901760
  %v141 = vsub.f32 %v139, %v140
  %v142 = vand.u32 %v141, 4294901760
  %143 = vmatpush1.msra.mxu0 %v142
  %144 = vmatprep.subr.mxu0 0.0
  %v145 = vand.u32 %v20, 4294901760
  %v146 = vsub.f32 %v20, %v145
  %v147 = vand.u32 %v146, 4294901760
  %v148 = vsub.f32 %v146, %v147
  %v149 = vand.u32 %v148, 4294901760
  %150 = vmatpush1.msra.mxu0 %v149
  %151 = vmatprep.subr.mxu0 0.0
  %v152 = vand.u32 %v19, 4294901760
  %v153 = vsub.f32 %v19, %v152
  %v154 = vand.u32 %v153, 4294901760
  %v155 = vsub.f32 %v153, %v154
  %v156 = vand.u32 %v155, 4294901760
  %157 = vmatpush1.msra.mxu0 %v156
  %158 = vmatprep.subr.mxu0 0.0
  %v159 = vand.u32 %v18, 4294901760
  %v160 = vsub.f32 %v18, %v159
  %v161 = vand.u32 %v160, 4294901760
  %v162 = vsub.f32 %v160, %v161
  %v163 = vand.u32 %v162, 4294901760
  %164 = vmatpush1.msra.mxu0 %v163
  %165 = vmatprep.subr.mxu0 0.0
  %v166 = vand.u32 %v17, 4294901760
  %v167 = vsub.f32 %v17, %v166
  %v168 = vand.u32 %v167, 4294901760
  %v169 = vsub.f32 %v167, %v168
  %v170 = vand.u32 %v169, 4294901760
  %171 = vmatpush1.msra.mxu0 %v170
  %172 = vmatprep.subr.mxu0 0.0
  %v173 = vand.u32 %v16, 4294901760
  %v174 = vsub.f32 %v16, %v173
  %v175 = vand.u32 %v174, 4294901760
  %v176 = vsub.f32 %v174, %v175
  %v177 = vand.u32 %v176, 4294901760
  %178 = vmatpush1.msra.mxu0 %v177
  %179 = vmatprep.subr.mxu0 0.0
  %v180 = vand.u32 %v15, 4294901760
  %v181 = vsub.f32 %v15, %v180
  %v182 = vand.u32 %v181, 4294901760
  %v183 = vsub.f32 %v181, %v182
  %v184 = vand.u32 %v183, 4294901760
  %185 = vmatpush1.msra.mxu0 %v184
  %186 = vmatprep.subr.mxu0 0.0
  %187 = vmatpush2.msra.mxu0 0.0
  %188 = vmatprep.subr.mxu0 0.0
  %189 = vmatpush2.msra.mxu0 0.0
  %190 = vmatprep.subr.mxu0 0.0
  %191 = vmatpush2.msra.mxu0 0.0
  %192 = vmatprep.subr.mxu0 0.0
  %193 = vmatpush2.msra.mxu0 0.0
  %194 = vmatprep.subr.mxu0 0.0
  %195 = vmatpush2.msra.mxu0 0.0
  %196 = vmatprep.subr.mxu0 0.0
  %197 = vmatpush2.msra.mxu0 0.0
  %198 = vmatprep.subr.mxu0 0.0
  %199 = vmatpush2.msra.mxu0 0.0
  %200 = vmatprep.subr.mxu0 0.0
  %201 = vmatpush2.msra.mxu0 0.0
  %202 = vmatprep.subr.mxu0 0.0
  %203 = vmatpush2.msra.mxu0 0.0
  %204 = vmatprep.subr.mxu0 0.0
  %205 = vmatpush2.msra.mxu0 0.0
  %206 = vmatprep.subr.mxu0 0.0
  %207 = vmatpush2.msra.mxu0 0.0
  %208 = vmatprep.subr.mxu0 0.0
  %209 = vmatpush2.msra.mxu0 0.0
  %210 = vmatprep.subr.mxu0 0.0
  %211 = vmatpush2.msra.mxu0 0.0
  %212 = vmatprep.subr.mxu0 0.0
  %213 = vmatpush2.msra.mxu0 0.0
  %214 = vmatprep.subr.mxu0 0.0
  %215 = vmatpush2.msra.mxu0 0.0
  %216 = vmatprep.subr.mxu0 0.0
  %217 = vmatpush2.msra.mxu0 0.0
  %218 = vmatprep.mubr.f32.mxu0 0.0
  %v219 = vand.u32 %v31, 4294901760
  %220 = vmatmul.mubr.f32.gmra.mxu0 %v219
  %v221 = vpop.f32.mrf.mxu0
  %v222 = vadd.f32 %v116, %v221
  %v223 = vpop.f32.mrf.mxu0
  %224 = vdwg.mxu0
  %225 = vmatprep.subr.mxu0 0.0
  %226 = vmatpush1.msra.mxu0 0.0
  %227 = vmatprep.subr.mxu0 0.0
  %228 = vmatpush1.msra.mxu0 0.0
  %229 = vmatprep.subr.mxu0 0.0
  %230 = vmatpush1.msra.mxu0 0.0
  %231 = vmatprep.subr.mxu0 0.0
  %232 = vmatpush1.msra.mxu0 0.0
  %233 = vmatprep.subr.mxu0 0.0
  %234 = vmatpush1.msra.mxu0 0.0
  %235 = vmatprep.subr.mxu0 0.0
  %236 = vmatpush1.msra.mxu0 0.0
  %237 = vmatprep.subr.mxu0 0.0
  %238 = vmatpush1.msra.mxu0 0.0
  %239 = vmatprep.subr.mxu0 0.0
  %240 = vmatpush1.msra.mxu0 0.0
  %241 = vmatprep.subr.mxu0 0.0
  %242 = vmatpush1.msra.mxu0 0.0
  %243 = vmatprep.subr.mxu0 0.0
  %v244 = vand.u32 %v35, 4294901760
  %v245 = vsub.f32 %v35, %v244
  %246 = vmatpush1.msra.mxu0 %v245
  %247 = vmatprep.subr.mxu0 0.0
  %v248 = vand.u32 %v20, 4294901760
  %v249 = vsub.f32 %v20, %v248
  %250 = vmatpush1.msra.mxu0 %v249
  %251 = vmatprep.subr.mxu0 0.0
  %v252 = vand.u32 %v19, 4294901760
  %v253 = vsub.f32 %v19, %v252
  %254 = vmatpush1.msra.mxu0 %v253
  %255 = vmatprep.subr.mxu0 0.0
  %v256 = vand.u32 %v18, 4294901760
  %v257 = vsub.f32 %v18, %v256
  %258 = vmatpush1.msra.mxu0 %v257
  %259 = vmatprep.subr.mxu0 0.0
  %v260 = vand.u32 %v17, 4294901760
  %v261 = vsub.f32 %v17, %v260
  %262 = vmatpush1.msra.mxu0 %v261
  %263 = vmatprep.subr.mxu0 0.0
  %v264 = vand.u32 %v16, 4294901760
  %v265 = vsub.f32 %v16, %v264
  %266 = vmatpush1.msra.mxu0 %v265
  %267 = vmatprep.subr.mxu0 0.0
  %v268 = vand.u32 %v15, 4294901760
  %v269 = vsub.f32 %v15, %v268
  %270 = vmatpush1.msra.mxu0 %v269
  %271 = vmatprep.subr.mxu0 0.0
  %272 = vmatpush2.msra.mxu0 0.0
  %273 = vmatprep.subr.mxu0 0.0
  %274 = vmatpush2.msra.mxu0 0.0
  %275 = vmatprep.subr.mxu0 0.0
  %276 = vmatpush2.msra.mxu0 0.0
  %277 = vmatprep.subr.mxu0 0.0
  %278 = vmatpush2.msra.mxu0 0.0
  %279 = vmatprep.subr.mxu0 0.0
  %280 = vmatpush2.msra.mxu0 0.0
  %281 = vmatprep.subr.mxu0 0.0
  %282 = vmatpush2.msra.mxu0 0.0
  %283 = vmatprep.subr.mxu0 0.0
  %284 = vmatpush2.msra.mxu0 0.0
  %285 = vmatprep.subr.mxu0 0.0
  %286 = vmatpush2.msra.mxu0 0.0
  %287 = vmatprep.subr.mxu0 0.0
  %288 = vmatpush2.msra.mxu0 0.0
  %289 = vmatprep.subr.mxu0 0.0
  %290 = vmatpush2.msra.mxu0 0.0
  %291 = vmatprep.subr.mxu0 0.0
  %292 = vmatpush2.msra.mxu0 0.0
  %293 = vmatprep.subr.mxu0 0.0
  %294 = vmatpush2.msra.mxu0 0.0
  %295 = vmatprep.subr.mxu0 0.0
  %296 = vmatpush2.msra.mxu0 0.0
  %297 = vmatprep.subr.mxu0 0.0
  %298 = vmatpush2.msra.mxu0 0.0
  %299 = vmatprep.subr.mxu0 0.0
  %300 = vmatpush2.msra.mxu0 0.0
  %301 = vmatprep.subr.mxu0 0.0
  %302 = vmatpush2.msra.mxu0 0.0
  %303 = vmatprep.mubr.f32.mxu0 0.0
  %v304 = vand.u32 %v31, 4294901760
  %v305 = vsub.f32 %v31, %v304
  %306 = vmatmul.mubr.f32.gmra.mxu0 %v305
  %v307 = vpop.f32.mrf.mxu0
  %v308 = vadd.f32 %v222, %v307
  %v309 = vpop.f32.mrf.mxu0
  %310 = vdwg.mxu0
  %311 = vmatprep.subr.mxu0 0.0
  %312 = vmatpush1.msra.mxu0 0.0
  %313 = vmatprep.subr.mxu0 0.0
  %314 = vmatpush1.msra.mxu0 0.0
  %315 = vmatprep.subr.mxu0 0.0
  %316 = vmatpush1.msra.mxu0 0.0
  %317 = vmatprep.subr.mxu0 0.0
  %318 = vmatpush1.msra.mxu0 0.0
  %319 = vmatprep.subr.mxu0 0.0
  %320 = vmatpush1.msra.mxu0 0.0
  %321 = vmatprep.subr.mxu0 0.0
  %322 = vmatpush1.msra.mxu0 0.0
  %323 = vmatprep.subr.mxu0 0.0
  %324 = vmatpush1.msra.mxu0 0.0
  %325 = vmatprep.subr.mxu0 0.0
  %326 = vmatpush1.msra.mxu0 0.0
  %327 = vmatprep.subr.mxu0 0.0
  %328 = vmatpush1.msra.mxu0 0.0
  %329 = vmatprep.subr.mxu0 0.0
  %v330 = vand.u32 %v35, 4294901760
  %331 = vmatpush1.msra.mxu0 %v330
  %332 = vmatprep.subr.mxu0 0.0
  %v333 = vand.u32 %v20, 4294901760
  %334 = vmatpush1.msra.mxu0 %v333
  %335 = vmatprep.subr.mxu0 0.0
  %v336 = vand.u32 %v19, 4294901760
  %337 = vmatpush1.msra.mxu0 %v336
  %338 = vmatprep.subr.mxu0 0.0
  %v339 = vand.u32 %v18, 4294901760
  %340 = vmatpush1.msra.mxu0 %v339
  %341 = vmatprep.subr.mxu0 0.0
  %v342 = vand.u32 %v17, 4294901760
  %343 = vmatpush1.msra.mxu0 %v342
  %344 = vmatprep.subr.mxu0 0.0
  %v345 = vand.u32 %v16, 4294901760
  %346 = vmatpush1.msra.mxu0 %v345
  %347 = vmatprep.subr.mxu0 0.0
  %v348 = vand.u32 %v15, 4294901760
  %349 = vmatpush1.msra.mxu0 %v348
  %350 = vmatprep.subr.mxu0 0.0
  %351 = vmatpush2.msra.mxu0 0.0
  %352 = vmatprep.subr.mxu0 0.0
  %353 = vmatpush2.msra.mxu0 0.0
  %354 = vmatprep.subr.mxu0 0.0
  %355 = vmatpush2.msra.mxu0 0.0
  %356 = vmatprep.subr.mxu0 0.0
  %357 = vmatpush2.msra.mxu0 0.0
  %358 = vmatprep.subr.mxu0 0.0
  %359 = vmatpush2.msra.mxu0 0.0
  %360 = vmatprep.subr.mxu0 0.0
  %361 = vmatpush2.msra.mxu0 0.0
  %362 = vmatprep.subr.mxu0 0.0
  %363 = vmatpush2.msra.mxu0 0.0
  %364 = vmatprep.subr.mxu0 0.0
  %365 = vmatpush2.msra.mxu0 0.0
  %366 = vmatprep.subr.mxu0 0.0
  %367 = vmatpush2.msra.mxu0 0.0
  %368 = vmatprep.subr.mxu0 0.0
  %369 = vmatpush2.msra.mxu0 0.0
  %370 = vmatprep.subr.mxu0 0.0
  %371 = vmatpush2.msra.mxu0 0.0
  %372 = vmatprep.subr.mxu0 0.0
  %373 = vmatpush2.msra.mxu0 0.0
  %374 = vmatprep.subr.mxu0 0.0
  %375 = vmatpush2.msra.mxu0 0.0
  %376 = vmatprep.subr.mxu0 0.0
  %377 = vmatpush2.msra.mxu0 0.0
  %378 = vmatprep.subr.mxu0 0.0
  %379 = vmatpush2.msra.mxu0 0.0
  %380 = vmatprep.subr.mxu0 0.0
  %381 = vmatpush2.msra.mxu0 0.0
  %382 = vmatprep.mubr.f32.mxu0 0.0
  %v383 = vand.u32 %v31, 4294901760
  %v384 = vsub.f32 %v31, %v383
  %v385 = vand.u32 %v384, 4294901760
  %386 = vmatmul.mubr.f32.gmra.mxu0 %v385
  %v387 = vpop.f32.mrf.mxu0
  %v388 = vadd.f32 %v308, %v387
  %v389 = vpop.f32.mrf.mxu0
  %390 = vdwg.mxu0
  %391 = vmatprep.subr.mxu0 0.0
  %392 = vmatpush1.msra.mxu0 0.0
  %393 = vmatprep.subr.mxu0 0.0
  %394 = vmatpush1.msra.mxu0 0.0
  %395 = vmatprep.subr.mxu0 0.0
  %396 = vmatpush1.msra.mxu0 0.0
  %397 = vmatprep.subr.mxu0 0.0
  %398 = vmatpush1.msra.mxu0 0.0
  %399 = vmatprep.subr.mxu0 0.0
  %400 = vmatpush1.msra.mxu0 0.0
  %401 = vmatprep.subr.mxu0 0.0
  %402 = vmatpush1.msra.mxu0 0.0
  %403 = vmatprep.subr.mxu0 0.0
  %404 = vmatpush1.msra.mxu0 0.0
  %405 = vmatprep.subr.mxu0 0.0
  %406 = vmatpush1.msra.mxu0 0.0
  %407 = vmatprep.subr.mxu0 0.0
  %408 = vmatpush1.msra.mxu0 0.0
  %409 = vmatprep.subr.mxu0 0.0
  %v410 = vand.u32 %v35, 4294901760
  %v411 = vsub.f32 %v35, %v410
  %v412 = vand.u32 %v411, 4294901760
  %413 = vmatpush1.msra.mxu0 %v412
  %414 = vmatprep.subr.mxu0 0.0
  %v415 = vand.u32 %v20, 4294901760
  %v416 = vsub.f32 %v20, %v415
  %v417 = vand.u32 %v416, 4294901760
  %418 = vmatpush1.msra.mxu0 %v417
  %419 = vmatprep.subr.mxu0 0.0
  %v420 = vand.u32 %v19, 4294901760
  %v421 = vsub.f32 %v19, %v420
  %v422 = vand.u32 %v421, 4294901760
  %423 = vmatpush1.msra.mxu0 %v422
  %424 = vmatprep.subr.mxu0 0.0
  %v425 = vand.u32 %v18, 4294901760
  %v426 = vsub.f32 %v18, %v425
  %v427 = vand.u32 %v426, 4294901760
  %428 = vmatpush1.msra.mxu0 %v427
  %429 = vmatprep.subr.mxu0 0.0
  %v430 = vand.u32 %v17, 4294901760
  %v431 = vsub.f32 %v17, %v430
  %v432 = vand.u32 %v431, 4294901760
  %433 = vmatpush1.msra.mxu0 %v432
  %434 = vmatprep.subr.mxu0 0.0
  %v435 = vand.u32 %v16, 4294901760
  %v436 = vsub.f32 %v16, %v435
  %v437 = vand.u32 %v436, 4294901760
  %438 = vmatpush1.msra.mxu0 %v437
  %439 = vmatprep.subr.mxu0 0.0
  %v440 = vand.u32 %v15, 4294901760
  %v441 = vsub.f32 %v15, %v440
  %v442 = vand.u32 %v441, 4294901760
  %443 = vmatpush1.msra.mxu0 %v442
  %444 = vmatprep.subr.mxu0 0.0
  %445 = vmatpush2.msra.mxu0 0.0
  %446 = vmatprep.subr.mxu0 0.0
  %447 = vmatpush2.msra.mxu0 0.0
  %448 = vmatprep.subr.mxu0 0.0
  %449 = vmatpush2.msra.mxu0 0.0
  %450 = vmatprep.subr.mxu0 0.0
  %451 = vmatpush2.msra.mxu0 0.0
  %452 = vmatprep.subr.mxu0 0.0
  %453 = vmatpush2.msra.mxu0 0.0
  %454 = vmatprep.subr.mxu0 0.0
  %455 = vmatpush2.msra.mxu0 0.0
  %456 = vmatprep.subr.mxu0 0.0
  %457 = vmatpush2.msra.mxu0 0.0
  %458 = vmatprep.subr.mxu0 0.0
  %459 = vmatpush2.msra.mxu0 0.0
  %460 = vmatprep.subr.mxu0 0.0
  %461 = vmatpush2.msra.mxu0 0.0
  %462 = vmatprep.subr.mxu0 0.0
  %463 = vmatpush2.msra.mxu0 0.0
  %464 = vmatprep.subr.mxu0 0.0
  %465 = vmatpush2.msra.mxu0 0.0
  %466 = vmatprep.subr.mxu0 0.0
  %467 = vmatpush2.msra.mxu0 0.0
  %468 = vmatprep.subr.mxu0 0.0
  %469 = vmatpush2.msra.mxu0 0.0
  %470 = vmatprep.subr.mxu0 0.0
  %471 = vmatpush2.msra.mxu0 0.0
  %472 = vmatprep.subr.mxu0 0.0
  %473 = vmatpush2.msra.mxu0 0.0
  %474 = vmatprep.subr.mxu0 0.0
  %475 = vmatpush2.msra.mxu0 0.0
  %476 = vmatprep.mubr.f32.mxu0 0.0
  %v477 = vand.u32 %v31, 4294901760
  %478 = vmatmul.mubr.f32.gmra.mxu0 %v477
  %v479 = vpop.f32.mrf.mxu0
  %v480 = vadd.f32 %v388, %v479
  %v481 = vpop.f32.mrf.mxu0
  %482 = vdwg.mxu0
  %483 = vmatprep.subr.mxu0 0.0
  %484 = vmatpush1.msra.mxu0 0.0
  %485 = vmatprep.subr.mxu0 0.0
  %486 = vmatpush1.msra.mxu0 0.0
  %487 = vmatprep.subr.mxu0 0.0
  %488 = vmatpush1.msra.mxu0 0.0
  %489 = vmatprep.subr.mxu0 0.0
  %490 = vmatpush1.msra.mxu0 0.0
  %491 = vmatprep.subr.mxu0 0.0
  %492 = vmatpush1.msra.mxu0 0.0
  %493 = vmatprep.subr.mxu0 0.0
  %494 = vmatpush1.msra.mxu0 0.0
  %495 = vmatprep.subr.mxu0 0.0
  %496 = vmatpush1.msra.mxu0 0.0
  %497 = vmatprep.subr.mxu0 0.0
  %498 = vmatpush1.msra.mxu0 0.0
  %499 = vmatprep.subr.mxu0 0.0
  %500 = vmatpush1.msra.mxu0 0.0
  %501 = vmatprep.subr.mxu0 0.0
  %v502 = vand.u32 %v35, 4294901760
  %503 = vmatpush1.msra.mxu0 %v502
  %504 = vmatprep.subr.mxu0 0.0
  %v505 = vand.u32 %v20, 4294901760
  %506 = vmatpush1.msra.mxu0 %v505
  %507 = vmatprep.subr.mxu0 0.0
  %v508 = vand.u32 %v19, 4294901760
  %509 = vmatpush1.msra.mxu0 %v508
  %510 = vmatprep.subr.mxu0 0.0
  %v511 = vand.u32 %v18, 4294901760
  %512 = vmatpush1.msra.mxu0 %v511
  %513 = vmatprep.subr.mxu0 0.0
  %v514 = vand.u32 %v17, 4294901760
  %515 = vmatpush1.msra.mxu0 %v514
  %516 = vmatprep.subr.mxu0 0.0
  %v517 = vand.u32 %v16, 4294901760
  %518 = vmatpush1.msra.mxu0 %v517
  %519 = vmatprep.subr.mxu0 0.0
  %v520 = vand.u32 %v15, 4294901760
  %521 = vmatpush1.msra.mxu0 %v520
  %522 = vmatprep.subr.mxu0 0.0
  %523 = vmatpush2.msra.mxu0 0.0
  %524 = vmatprep.subr.mxu0 0.0
  %525 = vmatpush2.msra.mxu0 0.0
  %526 = vmatprep.subr.mxu0 0.0
  %527 = vmatpush2.msra.mxu0 0.0
  %528 = vmatprep.subr.mxu0 0.0
  %529 = vmatpush2.msra.mxu0 0.0
  %530 = vmatprep.subr.mxu0 0.0
  %531 = vmatpush2.msra.mxu0 0.0
  %532 = vmatprep.subr.mxu0 0.0
  %533 = vmatpush2.msra.mxu0 0.0
  %534 = vmatprep.subr.mxu0 0.0
  %535 = vmatpush2.msra.mxu0 0.0
  %536 = vmatprep.subr.mxu0 0.0
  %537 = vmatpush2.msra.mxu0 0.0
  %538 = vmatprep.subr.mxu0 0.0
  %539 = vmatpush2.msra.mxu0 0.0
  %540 = vmatprep.subr.mxu0 0.0
  %541 = vmatpush2.msra.mxu0 0.0
  %542 = vmatprep.subr.mxu0 0.0
  %543 = vmatpush2.msra.mxu0 0.0
  %544 = vmatprep.subr.mxu0 0.0
  %545 = vmatpush2.msra.mxu0 0.0
  %546 = vmatprep.subr.mxu0 0.0
  %547 = vmatpush2.msra.mxu0 0.0
  %548 = vmatprep.subr.mxu0 0.0
  %549 = vmatpush2.msra.mxu0 0.0
  %550 = vmatprep.subr.mxu0 0.0
  %551 = vmatpush2.msra.mxu0 0.0
  %552 = vmatprep.subr.mxu0 0.0
  %553 = vmatpush2.msra.mxu0 0.0
  %554 = vmatprep.mubr.f32.mxu0 0.0
  %v555 = vand.u32 %v31, 4294901760
  %556 = vmatmul.mubr.f32.gmra.mxu0 %v555
  %v557 = vpop.f32.mrf.mxu0
  %v558 = vadd.f32 %v480, %v557
  %v559 = vpop.f32.mrf.mxu0
  %560 = vdwg.mxu0
  %vm561 = vcmask 15360
  %562 = vst.msk [vmem:[%s3] sm:$0xff] %vm561, %v558
  // Predicated region
  $region14: #{tpu_custom_call.1} parent=0 // pred_check
    _
  $region15: #{tpu_custom_call.1} parent=0 // pred_check_branch
    %564 = sbr.rel (0) target = $region17
  $region16: #{tpu_custom_call.1} parent=0 // pred_region
    _
  $region17: #{tpu_custom_call.1} parent=0 // pred_fallthru
    _
  // Predicated region
  $region18: #{tpu_custom_call.1} parent=0 // pred_check
    _
  $region19: #{tpu_custom_call.1} parent=0 // pred_check_branch
    %566 = sbr.rel (0) target = $region21
  $region20: #{tpu_custom_call.1} parent=0 // pred_region
    _
  $region21: #{tpu_custom_call.1} parent=0 // pred_fallthru
    _

</llo_original>
